<compile_context>
chip_gen: v6e
topology: v6e:2x2x1
jax: 0.10.0
libtpu: 0.0.40
codegen_flags: <defaults>
</compile_context>

<pallas_src>
import jax
import jax.numpy as jnp
from jax.experimental import pallas as pl
from jax.experimental.pallas import tpu as pltpu

_MiB = 1024 * 1024


def _se_kernel(x_ref, w1t_ref, b1_ref, w2t_ref, b2_ref, o_ref):
    # x_ref, o_ref: (Nb, C, HW)   w1t_ref: (C, Csq)   b1_ref: (1, Csq)
    # w2t_ref: (Csq, C)           b2_ref: (1, C)
    hw = x_ref.shape[-1]

    # squeeze: global average pool over the spatial (lane) dim, f32 accumulation.
    # Read x_ref here (short live range) instead of binding the slab to a value.
    s = jnp.sum(x_ref[...], axis=-1, dtype=jnp.float32) / jnp.float32(hw)   # (Nb, C)

    # fc1 (1x1 conv == matmul, weights pre-transposed) + ReLU -> (Nb, Csq)
    z = jnp.dot(s, w1t_ref[...], preferred_element_type=jnp.float32) + b1_ref[...]
    z = jnp.maximum(z, 0.0)

    # fc2 + Sigmoid -> (Nb, C)
    sc = jnp.dot(z, w2t_ref[...], preferred_element_type=jnp.float32) + b2_ref[...]
    sc = jax.nn.sigmoid(sc)

    # excite: per-channel scale broadcast over spatial dim. Multiply in f32
    # (matches the reference), re-reading x_ref so the full slab is never a
    # single long-lived value; single cast on the store.
    o_ref[...] = (sc[:, :, None] * x_ref[...]).astype(o_ref.dtype)


def _num_tensorcores_per_chip() -> int:
    """Best-effort TC-per-chip detection; default 1 (safe for v5e/v6e)."""
    try:
        info = pltpu.get_tpu_info()
        for attr in ("num_cores", "num_tensorcores", "tensorcore_count",
                     "cores_per_chip"):
            v = getattr(info, attr, None)
            if isinstance(v, int) and v > 0:
                return v
    except Exception:
        pass
    try:
        kind = jax.devices()[0].device_kind.lower()
        if "v7" in kind:
            return 2
    except Exception:
        pass
    return 1


def _vmem_capacity_bytes() -> int:
    """Best-effort physical VMEM size; default to the smallest (v7x, 64 MiB)."""
    try:
        info = pltpu.get_tpu_info()
        for attr in ("vmem_capacity_bytes", "vmem_bytes", "vmem_size_bytes"):
            v = getattr(info, attr, None)
            if isinstance(v, int) and v > 0:
                return v
    except Exception:
        pass
    return 64 * _MiB


def squeeze_excitation(x, w1, b1, w2, b2, *, block_budget_bytes=None):
    """x: (N, C, H, W); w1: (Csq, C); b1: (Csq,); w2: (C, Csq); b2: (C,)."""
    N, C, H, W = x.shape
    HW = H * W
    Csq = w1.shape[0]
    itemsize = jnp.dtype(x.dtype).itemsize

    # Generation-aware budgets: big-VMEM parts (v5e/v6e, 128 MiB) get larger
    # blocks and a 64 MiB scoped limit; v7x (64 MiB) gets 8 MiB blocks under a
    # 48 MiB limit (4 double-buffered x/o slabs = 32 MiB + tiny weights).
    vmem_cap = _vmem_capacity_bytes()
    if vmem_cap >= 96 * _MiB:
        vmem_limit = 64 * _MiB
        default_budget = 12 * _MiB
    else:
        vmem_limit = 48 * _MiB
        default_budget = 8 * _MiB
    if block_budget_bytes is None:
        block_budget_bytes = default_budget

    num_tc = _num_tensorcores_per_chip()

    # Lane-dense layout and wrapper-side weight transposes (free in XLA).
    x2d = x.reshape(N, C, HW)
    w1t = jnp.transpose(w1)          # (C, Csq)
    w2t = jnp.transpose(w2)          # (Csq, C)
    b1_2d = b1.reshape(1, Csq)
    b2_2d = b2.reshape(1, C)

    # Batch images per grid step under the per-block VMEM budget. cdiv tiling
    # (no divisor constraint) keeps blocks near the budget for any N; ragged
    # last block rows are discarded on writeback.
    slab_bytes = C * HW * itemsize
    nb = max(1, min(N, block_budget_bytes // slab_bytes))

    if num_tc >= 2 and N >= 2:
        # Two TensorCores: keep at least two grid steps so both get work,
        # and prefer an EVEN grid length so the parallel split is balanced.
        nb = min(nb, max(1, N // 2))
        if pl.cdiv(N, nb) > 1:
            for cand in range(nb, max(0, nb // 2), -1):
                if pl.cdiv(N, cand) % 2 == 0:
                    nb = cand
                    break

    grid = (pl.cdiv(N, nb),)

    # Advisory cost hint: HBM-bound (read + write of x), tiny matmuls.
    flops = N * (2 * C * Csq * 2 + 2 * C * HW)
    bytes_accessed = (2 * N * C * HW * itemsize
                      + (w1.size + w2.size + b1.size + b2.size) * itemsize)
    cost = pl.CostEstimate(flops=flops, transcendentals=N * C,
                           bytes_accessed=bytes_accessed)

    out2d = pl.pallas_call(
        _se_kernel,
        out_shape=jax.ShapeDtypeStruct((N, C, HW), x.dtype),
        grid_spec=pltpu.PrefetchScalarGridSpec(
            num_scalar_prefetch=0,
            grid=grid,
            in_specs=[
                # Default double-buffering; sweep pl.Buffered(3) here if
                # profiles show exposed DMA latency on v7x.
                pl.BlockSpec((nb, C, HW), lambda n: (n, 0, 0)),
                pl.BlockSpec((C, Csq), lambda n: (0, 0)),
                pl.BlockSpec((1, Csq), lambda n: (0, 0)),
                pl.BlockSpec((Csq, C), lambda n: (0, 0)),
                pl.BlockSpec((1, C), lambda n: (0, 0)),
            ],
            out_specs=pl.BlockSpec((nb, C, HW), lambda n: (n, 0, 0)),
        ),
        compiler_params=pltpu.CompilerParams(
            dimension_semantics=("parallel",),
            vmem_limit_bytes=vmem_limit,
        ),
        cost_estimate=cost,
    )(x2d, w1t, b1_2d, w2t, b2_2d)

    return out2d.reshape(N, C, H, W)


def _reference(x, w1, b1, w2, b2):
    s = jnp.mean(x.astype(jnp.float32), axis=(2, 3))           # (N, C)
    z = jnp.maximum(s @ w1.T + b1, 0.0)                        # (N, Csq)
    sc = jax.nn.sigmoid(z @ w2.T + b2)                         # (N, C)
    return (sc[:, :, None, None] * x).astype(x.dtype)


if __name__ == "__main__":
    # Module config: input_c=16, se_ratio=0.25 -> squeeze_c=4; expand_c=32.
    input_c, expand_c, se_ratio = 16, 32, 0.25
    squeeze_c = int(input_c * se_ratio)

    N, C, H, W = 2, expand_c, 16, 16

    key = jax.random.PRNGKey(0)
    kx, k1, k2, k3, k4 = jax.random.split(key, 5)

    x = jax.random.normal(kx, (N, C, H, W), dtype=jnp.float32)
    # fc1: Conv2d(expand_c -> squeeze_c, 1x1)  => weight (squeeze_c, expand_c)
    w1 = jax.random.normal(k1, (squeeze_c, expand_c), dtype=jnp.float32) * 0.1
    b1 = jax.random.normal(k2, (squeeze_c,), dtype=jnp.float32) * 0.1
    # fc2: Conv2d(squeeze_c -> expand_c, 1x1)  => weight (expand_c, squeeze_c)
    w2 = jax.random.normal(k3, (expand_c, squeeze_c), dtype=jnp.float32) * 0.1
    b2 = jax.random.normal(k4, (expand_c,), dtype=jnp.float32) * 0.1

    out = squeeze_excitation(x, w1, b1, w2, b2)
    out = jax.block_until_ready(out)

    ref = _reference(x, w1, b1, w2, b2)
    assert out.shape == (N, C, H, W)
    assert jnp.allclose(out, ref, atol=1e-5, rtol=1e-5), "mismatch vs reference"

    print("KERNEL_OK")
</pallas_src>

<mosaic_0001>
module attributes {stable_mosaic.version = 11 : i64} {
  func.func @_se_kernel(%arg0: i32, %arg1: memref<2x32x256xf32, #tpu.memory_space<vmem>>, %arg2: memref<32x4xf32, #tpu.memory_space<vmem>>, %arg3: memref<1x4xf32, #tpu.memory_space<vmem>>, %arg4: memref<4x32xf32, #tpu.memory_space<vmem>>, %arg5: memref<1x32xf32, #tpu.memory_space<vmem>>, %arg6: memref<2x32x256xf32, #tpu.memory_space<vmem>>) attributes {dimension_semantics = [#tpu.dimension_semantics<parallel>], iteration_bounds = array<i64: 1>, scalar_prefetch = 0 : i64, scratch_operands = 0 : i64, tpu.core_type = #tpu.core_type<tc>, window_params = [{transform_indices = @transform_0, window_bounds = array<i64: 2, 32, 256>}, {pipeline_mode = #tpu.pipeline_mode<synchronous>, transform_indices = @transform_1, window_bounds = array<i64: 32, 4>}, {pipeline_mode = #tpu.pipeline_mode<synchronous>, transform_indices = @transform_2, window_bounds = array<i64: 1, 4>}, {pipeline_mode = #tpu.pipeline_mode<synchronous>, transform_indices = @transform_3, window_bounds = array<i64: 4, 32>}, {pipeline_mode = #tpu.pipeline_mode<synchronous>, transform_indices = @transform_4, window_bounds = array<i64: 1, 32>}, {transform_indices = @transform_5, window_bounds = array<i64: 2, 32, 256>}]} {
    %c0 = arith.constant 0 : index
    %c0_0 = arith.constant 0 : index
    %c0_1 = arith.constant 0 : index
    %0 = vector.load %arg1[%c0, %c0_0, %c0_1] : memref<2x32x256xf32, #tpu.memory_space<vmem>>, vector<2x32x256xf32>
    %cst = arith.constant dense<0.000000e+00> : vector<2x32xf32>
    %1 = vector.multi_reduction <add>, %0, %cst [2] : vector<2x32x256xf32> to vector<2x32xf32>
    %cst_2 = arith.constant 2.560000e+02 : f32
    %2 = vector.broadcast %cst_2 : f32 to vector<2x32xf32>
    %3 = arith.divf %1, %2 : vector<2x32xf32>
    %c0_3 = arith.constant 0 : index
    %c0_4 = arith.constant 0 : index
    %4 = vector.load %arg2[%c0_3, %c0_4] : memref<32x4xf32, #tpu.memory_space<vmem>>, vector<32x4xf32>
    %cst_5 = arith.constant dense<0.000000e+00> : vector<2x4xf32>
    %5 = tpu.matmul %3, %4, %cst_5 {dimension_numbers = #tpu.dot_dimension_numbers<[1], [0], [0], [1], [0, 0, 1, 1], [], []>} : vector<2x32xf32>, vector<32x4xf32>, vector<2x4xf32> -> vector<2x4xf32>
    %c0_6 = arith.constant 0 : index
    %c0_7 = arith.constant 0 : index
    %6 = vector.load %arg3[%c0_6, %c0_7] : memref<1x4xf32, #tpu.memory_space<vmem>>, vector<1x4xf32>
    %7 = vector.broadcast %6 : vector<1x4xf32> to vector<2x4xf32>
    %8 = arith.addf %5, %7 : vector<2x4xf32>
    %cst_8 = arith.constant 0.000000e+00 : f32
    %9 = vector.broadcast %cst_8 : f32 to vector<2x4xf32>
    %10 = arith.maximumf %8, %9 : vector<2x4xf32>
    %c0_9 = arith.constant 0 : index
    %c0_10 = arith.constant 0 : index
    %11 = vector.load %arg4[%c0_9, %c0_10] : memref<4x32xf32, #tpu.memory_space<vmem>>, vector<4x32xf32>
    %cst_11 = arith.constant dense<0.000000e+00> : vector<2x32xf32>
    %12 = tpu.matmul %10, %11, %cst_11 {dimension_numbers = #tpu.dot_dimension_numbers<[1], [0], [0], [1], [0, 0, 1, 1], [], []>} : vector<2x4xf32>, vector<4x32xf32>, vector<2x32xf32> -> vector<2x32xf32>
    %c0_12 = arith.constant 0 : index
    %c0_13 = arith.constant 0 : index
    %13 = vector.load %arg5[%c0_12, %c0_13] : memref<1x32xf32, #tpu.memory_space<vmem>>, vector<1x32xf32>
    %14 = vector.broadcast %13 : vector<1x32xf32> to vector<2x32xf32>
    %15 = arith.addf %12, %14 : vector<2x32xf32>
    %16 = arith.negf %15 : vector<2x32xf32>
    %17 = math.exp %16 : vector<2x32xf32>
    %cst_14 = arith.constant 1.000000e+00 : f32
    %18 = vector.broadcast %cst_14 : f32 to vector<2x32xf32>
    %19 = arith.addf %18, %17 : vector<2x32xf32>
    %20 = arith.divf %18, %19 : vector<2x32xf32>
    %21 = vector.shape_cast %20 : vector<2x32xf32> to vector<2x32x1xf32>
    %c0_15 = arith.constant 0 : index
    %c0_16 = arith.constant 0 : index
    %c0_17 = arith.constant 0 : index
    %22 = vector.load %arg1[%c0_15, %c0_16, %c0_17] : memref<2x32x256xf32, #tpu.memory_space<vmem>>, vector<2x32x256xf32>
    %23 = vector.broadcast %21 : vector<2x32x1xf32> to vector<2x32x256xf32>
    %24 = arith.mulf %23, %22 : vector<2x32x256xf32>
    %c0_18 = arith.constant 0 : index
    %c0_19 = arith.constant 0 : index
    %c0_20 = arith.constant 0 : index
    %25 = vector.load %arg6[%c0_18, %c0_19, %c0_20] : memref<2x32x256xf32, #tpu.memory_space<vmem>>, vector<2x32x256xf32>
    tpu.vector_store %arg6[%c0_18, %c0_19, %c0_20], %24 {strides = array<i32>} : memref<2x32x256xf32, #tpu.memory_space<vmem>>, vector<2x32x256xf32>,
    return
  }
  func.func @transform_0(%arg0: i32) -> (i32, i32, i32) {
    %c0_i32 = arith.constant 0 : i32
    %c0_i32_0 = arith.constant 0 : i32
    %c0_i32_1 = arith.constant 0 : i32
    return %arg0, %c0_i32, %c0_i32_0 : i32, i32, i32
  }
  func.func @transform_1(%arg0: i32) -> (i32, i32) {
    %c0_i32 = arith.constant 0 : i32
    %c0_i32_0 = arith.constant 0 : i32
    %c0_i32_1 = arith.constant 0 : i32
    return %c0_i32, %c0_i32_0 : i32, i32
  }
  func.func @transform_2(%arg0: i32) -> (i32, i32) {
    %c0_i32 = arith.constant 0 : i32
    %c0_i32_0 = arith.constant 0 : i32
    %c0_i32_1 = arith.constant 0 : i32
    return %c0_i32, %c0_i32_0 : i32, i32
  }
  func.func @transform_3(%arg0: i32) -> (i32, i32) {
    %c0_i32 = arith.constant 0 : i32
    %c0_i32_0 = arith.constant 0 : i32
    %c0_i32_1 = arith.constant 0 : i32
    return %c0_i32, %c0_i32_0 : i32, i32
  }
  func.func @transform_4(%arg0: i32) -> (i32, i32) {
    %c0_i32 = arith.constant 0 : i32
    %c0_i32_0 = arith.constant 0 : i32
    %c0_i32_1 = arith.constant 0 : i32
    return %c0_i32, %c0_i32_0 : i32, i32
  }
  func.func @transform_5(%arg0: i32) -> (i32, i32, i32) {
    %c0_i32 = arith.constant 0 : i32
    %c0_i32_0 = arith.constant 0 : i32
    %c0_i32_1 = arith.constant 0 : i32
    return %arg0, %c0_i32, %c0_i32_0 : i32, i32, i32
  }
}

</mosaic_0001>

<llo_original>
// kernel: tpu_custom_call.1
$region0: #{tpu_custom_call.1}
  #allocation0 [shape = 'u32[]', space=smem, size = 0x4, offset = 0x4, fixed_abs, tag = 'smem constant byte address 0x4 - core index']
  #allocation1 [shape = 'u32[144,128]{1,0:T(1,128)}', space=vmem, size = 0x12000, scoped, tag = 'internal scratch']
  %s0 = inlined_call_operand.hbm [shape: f32[2,32,256], index: 0, kind: input, shape index: {}]
  %s1 = inlined_call_operand.vmem [shape: f32[32,4], index: 1, kind: input, shape index: {}]
  %s2 = inlined_call_operand.vmem [shape: f32[1,4], index: 2, kind: input, shape index: {}]
  %s3 = inlined_call_operand.vmem [shape: f32[4,32], index: 3, kind: input, shape index: {}]
  %s4 = inlined_call_operand.vmem [shape: f32[1,32], index: 4, kind: input, shape index: {}]
  %s5 = inlined_call_operand.hbm [shape: f32[2,32,256], index: 5, kind: output, shape index: {}]
  %s6 = sld [smem:[#allocation0]]
  $region34: #{tpu_custom_call.1} parent=0
    _
  %s8 = ssub.s32 1, %s6
  %s9 = scalar_select 0, %s8, %s6
  $region1: #{tpu_custom_call.1} parent=0
    #allocation2 [shape = 'u8[65536]{0}', space=vmem, size = 0x10000, scoped, tag = 'input window, operand 0, single buffered']
    #allocation3 [shape = 's32[1]{0}', space=sflag, size = 0x4, scoped, tag = 'scoped memory for tpu_custom_call.1']
    #allocation4 [shape = 's32[1]{0}', space=sflag, size = 0x4, scoped, tag = 'scoped memory for tpu_custom_call.1']
    #allocation5 [shape = 'u8[65536]{0}', space=vmem, size = 0x10000, scoped, tag = 'output window, operand 0, single buffered']
    %10 = vsyncpa [#allocation3], 0
    %11 = vsyncpa [#allocation4], 0
    // Predicated region
    $region2: #{tpu_custom_call.1} parent=1 // pred_check
      _
    $region3: #{tpu_custom_call.1} parent=1 // pred_check_branch
      %13 = sbr.rel (0) target = $region5
    $region4: #{tpu_custom_call.1} parent=1 // pred_region
      %s15 = ssub.s32 2048, 2048
      %16 = vsyncadd [#allocation3], %s15
      %s17 = sshll.u32 [#allocation2], 4
      %s18 = int_to_ptr.vmem [resolvable:$true] %s17
      %23 = dma.hbm_to_vmem [thread:$0]  %s0, 2048, %s18, [#allocation3], 256, 256, 16
    $region5: #{tpu_custom_call.1} parent=1 // pred_fallthru
      _
    // Predicated region
    $region6: #{tpu_custom_call.1} parent=1 // pred_check
      _
    $region7: #{tpu_custom_call.1} parent=1 // pred_check_branch
      %25 = sbr.rel (0) target = $region9
    $region8: #{tpu_custom_call.1} parent=1 // pred_region
      _
    $region9: #{tpu_custom_call.1} parent=1 // pred_fallthru
      _
    // Predicated region
    $region10: #{tpu_custom_call.1} parent=1 // pred_check
      _
    $region11: #{tpu_custom_call.1} parent=1 // pred_check_branch
      %27 = sbr.rel (0) target = $region13
    $region12: #{tpu_custom_call.1} parent=1 // pred_region
      _
    $region13: #{tpu_custom_call.1} parent=1 // pred_fallthru
      _
    // Predicated region
    $region14: #{tpu_custom_call.1} parent=1 // pred_check
      _
    $region15: #{tpu_custom_call.1} parent=1 // pred_check_branch
      %29 = sbr.rel (0) target = $region17
    $region16: #{tpu_custom_call.1} parent=1 // pred_region
      _
    $region17: #{tpu_custom_call.1} parent=1 // pred_fallthru
      _
    // Predicated region
    $region18: #{tpu_custom_call.1} parent=1 // pred_check
      _
    $region19: #{tpu_custom_call.1} parent=1 // pred_check_branch
      %31 = sbr.rel (0) target = $region21
    $region20: #{tpu_custom_call.1} parent=1 // pred_region
      _
    $region21: #{tpu_custom_call.1} parent=1 // pred_fallthru
      _
    // Predicated region
    $region22: #{tpu_custom_call.1} parent=1 // pred_check
      _
    $region23: #{tpu_custom_call.1} parent=1 // pred_check_branch
      %33 = sbr.rel (0) target = $region25
    $region24: #{tpu_custom_call.1} parent=1 // pred_region
      %34 = dma.done [#allocation3], 2048
    $region25: #{tpu_custom_call.1} parent=1 // pred_fallthru
      _
    %v35 = vld [vmem:[#allocation2] sm:$0xff]
    %v36 = vld [vmem:[#allocation2 + $0x8] sm:$0xff]
    %v37 = vld [vmem:[#allocation2 + $0x10] sm:$0xff]
    %v38 = vld [vmem:[#allocation2 + $0x18] sm:$0xff]
    %v39 = vld [vmem:[#allocation2 + $0x20] sm:$0xff]
    %v40 = vld [vmem:[#allocation2 + $0x28] sm:$0xff]
    %v41 = vld [vmem:[#allocation2 + $0x30] sm:$0xff]
    %v42 = vld [vmem:[#allocation2 + $0x38] sm:$0xff]
    %v43 = vld [vmem:[#allocation2 + $0x40] sm:$0xff]
    %v44 = vld [vmem:[#allocation2 + $0x48] sm:$0xff]
    %v45 = vld [vmem:[#allocation2 + $0x50] sm:$0xff]
    %v46 = vld [vmem:[#allocation2 + $0x58] sm:$0xff]
    %v47 = vld [vmem:[#allocation2 + $0x60] sm:$0xff]
    %v48 = vld [vmem:[#allocation2 + $0x68] sm:$0xff]
    %v49 = vld [vmem:[#allocation2 + $0x70] sm:$0xff]
    %v50 = vld [vmem:[#allocation2 + $0x78] sm:$0xff]
    %v51 = vadd.f32 %v35, %v36
    %52 = vadd.xlane.f32.xlu0 %v51
    %v53 = vpop.xlane.xlu0 %52
    %v54 = vadd.f32 %v37, %v38
    %55 = vadd.xlane.f32.xlu0 %v54
    %v56 = vpop.xlane.xlu0 %55
    %v57 = vadd.f32 %v39, %v40
    %58 = vadd.xlane.f32.xlu0 %v57
    %v59 = vpop.xlane.xlu0 %58
    %v60 = vadd.f32 %v41, %v42
    %61 = vadd.xlane.f32.xlu0 %v60
    %v62 = vpop.xlane.xlu0 %61
    %v63 = vadd.f32 %v43, %v44
    %64 = vadd.xlane.f32.xlu0 %v63
    %v65 = vpop.xlane.xlu0 %64
    %v66 = vadd.f32 %v45, %v46
    %67 = vadd.xlane.f32.xlu0 %v66
    %v68 = vpop.xlane.xlu0 %67
    %v69 = vadd.f32 %v47, %v48
    %70 = vadd.xlane.f32.xlu0 %v69
    %v71 = vpop.xlane.xlu0 %70
    %v72 = vadd.f32 %v49, %v50
    %73 = vadd.xlane.f32.xlu0 %v72
    %v74 = vpop.xlane.xlu0 %73
    %v75 = vrcp.pop 256.0
    %v76 = vmul.f32 %v53, %v75
    %v77 = vmul.f32 %v56, %v75
    %v78 = vmul.f32 %v59, %v75
    %v79 = vmul.f32 %v62, %v75
    %v80 = vmul.f32 %v65, %v75
    %v81 = vmul.f32 %v68, %v75
    %v82 = vmul.f32 %v71, %v75
    %v83 = vmul.f32 %v74, %v75
    %v84 = vld [vmem:[%s1] sm:$0xff]
    %v85 = vld [vmem:[%s1 + $0x8] sm:$0xff]
    %v86 = vld [vmem:[%s1 + $0x10] sm:$0xff]
    %v87 = vld [vmem:[%s1 + $0x18] sm:$0xff]
    %v88 = vld [vmem:[%s2] sm:$0x1]
    %v90 = vlaneseq
    %v91 = vshrl.u32 %v90, 7
    %v92 = vsub.s32 0, %v91
    %v93 = vrot.slane %v88, %v92
    %v103 = vlaneseq
    %v104 = vand.u32 %v103, 127
    %v105 = vlaneseq
    %v106 = vshrl.u32 %v105, 7
    %v107 = vsub.s32 %v104, %v106
    %v108 = vrot.slane %v76, %v107
    %v109 = vadd.s32 %v104, 4294967288
    %v110 = vlaneseq
    %v111 = vshrl.u32 %v110, 7
    %v112 = vsub.s32 %v109, %v111
    %v113 = vrot.slane %v77, %v112
    %vm114 = vcmask 130112
    %v115 = vsel %vm114, %v113, %v108
    %v116 = vadd.s32 %v104, 4294967280
    %v117 = vlaneseq
    %v118 = vshrl.u32 %v117, 7
    %v119 = vsub.s32 %v116, %v118
    %v120 = vrot.slane %v78, %v119
    %vm121 = vcmask 195712
    %v122 = vsel %vm121, %v120, %v115
    %v123 = vadd.s32 %v104, 4294967272
    %v124 = vlaneseq
    %v125 = vshrl.u32 %v124, 7
    %v126 = vsub.s32 %v123, %v125
    %v127 = vrot.slane %v79, %v126
    %vm128 = vcmask 261312
    %v129 = vsel %vm128, %v127, %v122
    %v130 = vlaneseq
    %v131 = vshrl.u32 %v130, 7
    %v132 = vsub.s32 %v104, %v131
    %v133 = vrot.slane %v80, %v132
    %v134 = vlaneseq
    %v135 = vshrl.u32 %v134, 7
    %v136 = vsub.s32 %v109, %v135
    %v137 = vrot.slane %v81, %v136
    %v138 = vsel %vm114, %v137, %v133
    %v139 = vlaneseq
    %v140 = vshrl.u32 %v139, 7
    %v141 = vsub.s32 %v116, %v140
    %v142 = vrot.slane %v82, %v141
    %v143 = vsel %vm121, %v142, %v138
    %v144 = vlaneseq
    %v145 = vshrl.u32 %v144, 7
    %v146 = vsub.s32 %v123, %v145
    %v147 = vrot.slane %v83, %v146
    %v148 = vsel %vm128, %v147, %v143
    %vm149 = vcmask 1041409
    %v150 = vsel %vm149, %v148, %v129
    %vm151 = vcmask 261120
    %v152 = vsel %vm151, %v150, 0
    %154 = vmatprep.subr.mxu0 0.0
    %155 = vmatpush1.msra.mxu0 0.0
    %156 = vmatprep.subr.mxu0 0.0
    %157 = vmatpush1.msra.mxu0 0.0
    %158 = vmatprep.subr.mxu0 0.0
    %159 = vmatpush1.msra.mxu0 0.0
    %160 = vmatprep.subr.mxu0 0.0
    %161 = vmatpush1.msra.mxu0 0.0
    %162 = vmatprep.subr.mxu0 0.0
    %163 = vmatpush1.msra.mxu0 0.0
    %164 = vmatprep.subr.mxu0 0.0
    %165 = vmatpush1.msra.mxu0 0.0
    %166 = vmatprep.subr.mxu0 0.0
    %167 = vmatpush1.msra.mxu0 0.0
    %168 = vmatprep.subr.mxu0 0.0
    %169 = vmatpush1.msra.mxu0 0.0
    %170 = vmatprep.subr.mxu0 0.0
    %171 = vmatpush1.msra.mxu0 0.0
    %172 = vmatprep.subr.mxu0 0.0
    %173 = vmatpush1.msra.mxu0 0.0
    %174 = vmatprep.subr.mxu0 0.0
    %175 = vmatpush1.msra.mxu0 0.0
    %176 = vmatprep.subr.mxu0 0.0
    %177 = vmatpush1.msra.mxu0 0.0
    %178 = vmatprep.subr.mxu0 0.0
    %179 = vmatpush1.msra.mxu0 %v87
    %180 = vmatprep.subr.mxu0 0.0
    %181 = vmatpush1.msra.mxu0 %v86
    %182 = vmatprep.subr.mxu0 0.0
    %183 = vmatpush1.msra.mxu0 %v85
    %184 = vmatprep.subr.mxu0 0.0
    %185 = vmatpush1.msra.mxu0 %v84
    %186 = vmatprep.subr.mxu0 0.0
    %187 = vmatpush2.msra.mxu0 0.0
    %188 = vmatprep.subr.mxu0 0.0
    %189 = vmatpush2.msra.mxu0 0.0
    %190 = vmatprep.subr.mxu0 0.0
    %191 = vmatpush2.msra.mxu0 0.0
    %192 = vmatprep.subr.mxu0 0.0
    %193 = vmatpush2.msra.mxu0 0.0
    %194 = vmatprep.subr.mxu0 0.0
    %195 = vmatpush2.msra.mxu0 0.0
    %196 = vmatprep.subr.mxu0 0.0
    %197 = vmatpush2.msra.mxu0 0.0
    %198 = vmatprep.subr.mxu0 0.0
    %199 = vmatpush2.msra.mxu0 0.0
    %200 = vmatprep.subr.mxu0 0.0
    %201 = vmatpush2.msra.mxu0 0.0
    %202 = vmatprep.subr.mxu0 0.0
    %203 = vmatpush2.msra.mxu0 0.0
    %204 = vmatprep.subr.mxu0 0.0
    %205 = vmatpush2.msra.mxu0 0.0
    %206 = vmatprep.subr.mxu0 0.0
    %207 = vmatpush2.msra.mxu0 0.0
    %208 = vmatprep.subr.mxu0 0.0
    %209 = vmatpush2.msra.mxu0 0.0
    %210 = vmatprep.subr.mxu0 0.0
    %211 = vmatpush2.msra.mxu0 0.0
    %212 = vmatprep.subr.mxu0 0.0
    %213 = vmatpush2.msra.mxu0 0.0
    %214 = vmatprep.subr.mxu0 0.0
    %215 = vmatpush2.msra.mxu0 0.0
    %216 = vmatprep.subr.mxu0 0.0
    %217 = vmatpush2.msra.mxu0 0.0
    %218 = vmatprep.mubr.f32.mxu0 0.0
    %219 = vmatmul.mubr.f32.gmra.mxu0 %v152
    %v220 = vpop.f32.mrf.mxu0
    %v221 = vadd.f32 %v93, %v220
    %v222 = vpop.f32.mrf.mxu0
    %223 = vdwg.mxu0
    %v224 = vmax.f32 %v221, 0.0
    %v225 = vld [vmem:[%s3] sm:$0xf]
    %v226 = vld [vmem:[%s4] sm:$0x1]
    %v228 = vlaneseq
    %v229 = vshrl.u32 %v228, 7
    %v230 = vsub.s32 0, %v229
    %v231 = vrot.slane %v226, %v230
    %vm233 = vcmask 31744
    %v235 = vsel %vm233, %v224, 0
    %vm237 = vcmask 1043456
    %v239 = vsel %vm237, %v225, 0
    %241 = vmatprep.subr.mxu0 0.0
    %242 = vmatpush1.msra.mxu0 0.0
    %243 = vmatprep.subr.mxu0 0.0
    %244 = vmatpush1.msra.mxu0 0.0
    %245 = vmatprep.subr.mxu0 0.0
    %246 = vmatpush1.msra.mxu0 0.0
    %247 = vmatprep.subr.mxu0 0.0
    %248 = vmatpush1.msra.mxu0 0.0
    %249 = vmatprep.subr.mxu0 0.0
    %250 = vmatpush1.msra.mxu0 0.0
    %251 = vmatprep.subr.mxu0 0.0
    %252 = vmatpush1.msra.mxu0 0.0
    %253 = vmatprep.subr.mxu0 0.0
    %254 = vmatpush1.msra.mxu0 0.0
    %255 = vmatprep.subr.mxu0 0.0
    %256 = vmatpush1.msra.mxu0 0.0
    %257 = vmatprep.subr.mxu0 0.0
    %258 = vmatpush1.msra.mxu0 0.0
    %259 = vmatprep.subr.mxu0 0.0
    %260 = vmatpush1.msra.mxu0 0.0
    %261 = vmatprep.subr.mxu0 0.0
    %262 = vmatpush1.msra.mxu0 0.0
    %263 = vmatprep.subr.mxu0 0.0
    %264 = vmatpush1.msra.mxu0 0.0
    %265 = vmatprep.subr.mxu0 0.0
    %266 = vmatpush1.msra.mxu0 0.0
    %267 = vmatprep.subr.mxu0 0.0
    %268 = vmatpush1.msra.mxu0 0.0
    %269 = vmatprep.subr.mxu0 0.0
    %270 = vmatpush1.msra.mxu0 0.0
    %271 = vmatprep.subr.mxu0 0.0
    %272 = vmatpush1.msra.mxu0 %v239
    %273 = vmatprep.subr.mxu0 0.0
    %274 = vmatpush2.msra.mxu0 0.0
    %275 = vmatprep.subr.mxu0 0.0
    %276 = vmatpush2.msra.mxu0 0.0
    %277 = vmatprep.subr.mxu0 0.0
    %278 = vmatpush2.msra.mxu0 0.0
    %279 = vmatprep.subr.mxu0 0.0
    %280 = vmatpush2.msra.mxu0 0.0
    %281 = vmatprep.subr.mxu0 0.0
    %282 = vmatpush2.msra.mxu0 0.0
    %283 = vmatprep.subr.mxu0 0.0
    %284 = vmatpush2.msra.mxu0 0.0
    %285 = vmatprep.subr.mxu0 0.0
    %286 = vmatpush2.msra.mxu0 0.0
    %287 = vmatprep.subr.mxu0 0.0
    %288 = vmatpush2.msra.mxu0 0.0
    %289 = vmatprep.subr.mxu0 0.0
    %290 = vmatpush2.msra.mxu0 0.0
    %291 = vmatprep.subr.mxu0 0.0
    %292 = vmatpush2.msra.mxu0 0.0
    %293 = vmatprep.subr.mxu0 0.0
    %294 = vmatpush2.msra.mxu0 0.0
    %295 = vmatprep.subr.mxu0 0.0
    %296 = vmatpush2.msra.mxu0 0.0
    %297 = vmatprep.subr.mxu0 0.0
    %298 = vmatpush2.msra.mxu0 0.0
    %299 = vmatprep.subr.mxu0 0.0
    %300 = vmatpush2.msra.mxu0 0.0
    %301 = vmatprep.subr.mxu0 0.0
    %302 = vmatpush2.msra.mxu0 0.0
    %303 = vmatprep.subr.mxu0 0.0
    %304 = vmatpush2.msra.mxu0 0.0
    %305 = vmatprep.mubr.f32.mxu0 0.0
    %306 = vmatmul.mubr.f32.gmra.mxu0 %v235
    %v307 = vpop.f32.mrf.mxu0
    %v308 = vadd.f32 %v231, %v307
    %v309 = vpop.f32.mrf.mxu0
    %310 = vdwg.mxu0
    %v311 = vxor.u32 %v308, 2147483648
    %v312 = vmul.f32 %v311, 1.442695
    %v313 = vpow.pop %v312
    %v314 = vadd.f32 %v313, 1.0
    %v315 = vrcp.pop %v314
    %v316 = vmul.f32 1.0, %v315
    %v317 = vlaneseq
    %v318 = vshrl.u32 %v317, 7
    %v319 = vsub.s32 0, %v318
    %v320 = vrot.slane %v316, %v319
    %322 = vbcast.lane.b32.xlu0 %v320, 256
    %v323 = vpop.permute.xlu0 %322
    %s325 = sor.u32 256, 8
    %326 = vbcast.lane.b32.xlu0 %v320, %s325
    %v327 = vpop.permute.xlu0 %326
    %s329 = sor.u32 256, 16
    %330 = vbcast.lane.b32.xlu0 %v320, %s329
    %v331 = vpop.permute.xlu0 %330
    %s333 = sor.u32 256, 24
    %334 = vbcast.lane.b32.xlu0 %v320, %s333
    %v335 = vpop.permute.xlu0 %334
    %v336 = vlaneseq
    %v337 = vshrl.u32 %v336, 7
    %v338 = vsub.s32 1, %v337
    %v339 = vrot.slane %v316, %v338
    %341 = vbcast.lane.b32.xlu0 %v339, 256
    %v342 = vpop.permute.xlu0 %341
    %s344 = sor.u32 256, 8
    %345 = vbcast.lane.b32.xlu0 %v339, %s344
    %v346 = vpop.permute.xlu0 %345
    %s348 = sor.u32 256, 16
    %349 = vbcast.lane.b32.xlu0 %v339, %s348
    %v350 = vpop.permute.xlu0 %349
    %s352 = sor.u32 256, 24
    %353 = vbcast.lane.b32.xlu0 %v339, %s352
    %v354 = vpop.permute.xlu0 %353
    %v355 = vmul.f32 %v323, %v35
    %v356 = vmul.f32 %v323, %v36
    %v357 = vmul.f32 %v327, %v37
    %v358 = vmul.f32 %v327, %v38
    %v359 = vmul.f32 %v331, %v39
    %v360 = vmul.f32 %v331, %v40
    %v361 = vmul.f32 %v335, %v41
    %v362 = vmul.f32 %v335, %v42
    %v363 = vmul.f32 %v342, %v43
    %v364 = vmul.f32 %v342, %v44
    %v365 = vmul.f32 %v346, %v45
    %v366 = vmul.f32 %v346, %v46
    %v367 = vmul.f32 %v350, %v47
    %v368 = vmul.f32 %v350, %v48
    %v369 = vmul.f32 %v354, %v49
    %v370 = vmul.f32 %v354, %v50
    %371 = vst [vmem:[#allocation5] sm:$0xff] %v355
    %372 = vst [vmem:[#allocation5 + $0x8] sm:$0xff] %v356
    %373 = vst [vmem:[#allocation5 + $0x10] sm:$0xff] %v357
    %374 = vst [vmem:[#allocation5 + $0x18] sm:$0xff] %v358
    %375 = vst [vmem:[#allocation5 + $0x20] sm:$0xff] %v359
    %376 = vst [vmem:[#allocation5 + $0x28] sm:$0xff] %v360
    %377 = vst [vmem:[#allocation5 + $0x30] sm:$0xff] %v361
    %378 = vst [vmem:[#allocation5 + $0x38] sm:$0xff] %v362
    %379 = vst [vmem:[#allocation5 + $0x40] sm:$0xff] %v363
    %380 = vst [vmem:[#allocation5 + $0x48] sm:$0xff] %v364
    %381 = vst [vmem:[#allocation5 + $0x50] sm:$0xff] %v365
    %382 = vst [vmem:[#allocation5 + $0x58] sm:$0xff] %v366
    %383 = vst [vmem:[#allocation5 + $0x60] sm:$0xff] %v367
    %384 = vst [vmem:[#allocation5 + $0x68] sm:$0xff] %v368
    %385 = vst [vmem:[#allocation5 + $0x70] sm:$0xff] %v369
    %386 = vst [vmem:[#allocation5 + $0x78] sm:$0xff] %v370
    // Predicated region
    $region26: #{tpu_custom_call.1} parent=1 // pred_check
      _
    $region27: #{tpu_custom_call.1} parent=1 // pred_check_branch
      %388 = sbr.rel (0) target = $region29
    $region28: #{tpu_custom_call.1} parent=1 // pred_region
      %s390 = ssub.s32 2048, 2048
      %391 = vsyncadd [#allocation4], %s390
      %s392 = sshll.u32 [#allocation5], 4
      %s393 = int_to_ptr.vmem [resolvable:$true] %s392
      %398 = dma.vmem_to_hbm [thread:$0]  %s393, 2048, %s5, [#allocation4], 256, 256, 16
    $region29: #{tpu_custom_call.1} parent=1 // pred_fallthru
      _
    // Predicated region
    $region30: #{tpu_custom_call.1} parent=1 // pred_check
      _
    $region31: #{tpu_custom_call.1} parent=1 // pred_check_branch
      %400 = sbr.rel (0) target = $region33
    $region32: #{tpu_custom_call.1} parent=1 // pred_region
      %401 = dma.done [#allocation4], 2048
    $region33: #{tpu_custom_call.1} parent=1 // pred_fallthru
      _
    %402 = vsyncpa [#allocation3], 1
    %403 = vsyncpa [#allocation4], 1

</llo_original>
